<compile_context>
chip_gen: v5e
topology: v5e:2x2
jax: 0.10.0
libtpu: 0.0.40
codegen_flags: <defaults>
</compile_context>

<pallas_src>
import functools

import jax
import jax.numpy as jnp
from jax import lax
from jax.experimental import pallas as pl
from jax.experimental.pallas import tpu as pltpu


def _round_up(x, m):
    return (x + m - 1) // m * m


def _gather_kernel(ids_ref, w_hbm, out_ref, sem, *,
                   vocab_start, vocab_size_local, token_block, unroll):
    """One token tile: masked row-gather from the HBM weight shard into out_ref.

    ids_ref : (N_pad,) int32  SMEM (scalar prefetch) -- full-vocab token ids
    w_hbm   : (Vp, D)  float  HBM (memory_space=pl.ANY)
    out_ref : (TB, D)  float  VMEM output block (rows DMA'd into directly)
    sem     : single DMA semaphore (counts completions; drained by count)
    """
    i = pl.program_id(0)
    base = i * token_block
    vocab_end = vocab_start + vocab_size_local

    # 1) One unmasked full-tile zero store. Covers out-of-shard tokens and the
    #    -1 padding rows. Issued before any row DMA targets out_ref, so the
    #    store is ordered ahead of every DMA landing (no race).
    out_ref[...] = jnp.zeros_like(out_ref)

    # 2) Issue one (1, D) row DMA per in-shard token, straight into its out_ref
    #    row (no staging buffer). Destination rows are all distinct, so every
    #    copy can be in flight simultaneously; a single DMA semaphore counts
    #    completions. Out-of-shard tokens skip the DMA entirely (each rank only
    #    reads rows it owns). Hand-unrolled by `unroll` tokens per fori_loop
    #    iteration so descriptor pushes / address math of neighbors overlap.
    def issue_group(g, cnt):
        t0 = g * unroll
        for u in range(unroll):
            t = t0 + u
            tok = ids_ref[base + t]
            in_shard = jnp.logical_and(tok >= vocab_start, tok < vocab_end)
            local = jnp.where(in_shard, tok - vocab_start, 0)

            @pl.when(in_shard)
            def _():
                pltpu.make_async_copy(
                    w_hbm.at[pl.ds(local, 1), :],
                    out_ref.at[pl.ds(t, 1), :],
                    sem,
                ).start()

            cnt = cnt + in_shard.astype(jnp.int32)
        return cnt

    cnt = lax.fori_loop(0, token_block // unroll, issue_group, jnp.int32(0))

    # 3) Drain: every issued copy moved the same (1, D) byte count on the same
    #    semaphore, so a generic (1, D) descriptor performs each wait; after
    #    exactly `cnt` waits the semaphore is back to zero and all gathered
    #    rows have landed in out_ref before the pipeline writes it back.
    @pl.loop(0, cnt)
    def _(idx):
        pltpu.make_async_copy(
            w_hbm.at[pl.ds(0, 1), :],
            out_ref.at[pl.ds(0, 1), :],
            sem,
        ).wait()


def vocab_parallel_embedding_forward(x, weight_shard, vocab_start_idx, *,
                                     token_block=512, unroll=8):
    """Per-rank partial forward of VocabParallelEmbedding (before all-reduce).

    x            : [B, S] int32 token ids over the FULL vocabulary
    weight_shard : [Vp, D] this rank's vocab shard
    returns      : [B, S, D] partial embeddings (zeros for tokens outside this shard)
    """
    b, s = x.shape
    vp, d = weight_shard.shape
    n = b * s
    itemsize = jnp.dtype(weight_shard.dtype).itemsize

    # --- tile-size selection ---
    tb = int(token_block)
    # never larger than the (padded) token count
    tb = min(tb, max(8, _round_up(n, 8)))
    # guarantee >= 2 grid steps whenever possible so dimension_semantics=
    # ("parallel",) can shard token tiles across both v7x TensorCores
    if n > 8:
        tb = min(tb, _round_up(pl.cdiv(n, 2), 8))
    # keep the double-buffered output tile within the default scoped-VMEM
    # budget (~12 MiB per buffer); also fits v7x's 64 MiB physical VMEM
    vmem_rows = max(8, ((12 * 1024 * 1024) // (d * itemsize)) // 8 * 8)
    tb = max(8, min(tb, vmem_rows))
    tb = _round_up(tb, 8)

    group = unroll if (unroll > 0 and tb % unroll == 0) else 8  # 8 always divides tb

    nb = pl.cdiv(n, tb)
    n_pad = nb * tb

    # Pad ids up to a multiple of tb; pad id -1 is out-of-shard for every rank,
    # so padded rows stay zero and are sliced off below.
    ids = x.reshape(n).astype(jnp.int32)
    if n_pad != n:
        ids = jnp.concatenate(
            [ids, jnp.full((n_pad - n,), -1, dtype=jnp.int32)])
    # TODO(synk): for prefill-scale B*S, chunk the call (or use a per-tile SMEM
    # BlockSpec for ids) instead of scalar-prefetching the whole padded array.

    kernel = functools.partial(
        _gather_kernel,
        vocab_start=int(vocab_start_idx),
        vocab_size_local=int(vp),
        token_block=int(tb),
        unroll=int(group),
    )

    out_flat = pl.pallas_call(
        kernel,
        out_shape=jax.ShapeDtypeStruct((n_pad, d), weight_shard.dtype),
        grid_spec=pltpu.PrefetchScalarGridSpec(
            num_scalar_prefetch=1,                  # ids -> SMEM
            grid=(nb,),
            in_specs=[
                # weight shard stays in HBM; rows are DMA-gathered on demand
                pl.BlockSpec(memory_space=pl.ANY),
            ],
            out_specs=pl.BlockSpec((tb, d), lambda i, ids: (i, 0)),
            scratch_shapes=[
                pltpu.SemaphoreType.DMA,            # single completion-counting sem
            ],
        ),
        compiler_params=pltpu.CompilerParams(
            dimension_semantics=("parallel",),      # token tiles shard across TCs (v7x)
        ),
    )(ids, weight_shard)

    return out_flat[:n].reshape(b, s, d)


if __name__ == "__main__":
    # --- module config (synthetic, deterministic) ---
    tp_size = 2                  # simulated tensor-parallel world size
    num_embeddings = 64          # full vocabulary
    embedding_dim = 128
    assert num_embeddings % tp_size == 0
    vocab_per_partition = num_embeddings // tp_size

    key = jax.random.PRNGKey(0)
    k_w, k_x1, k_x2 = jax.random.split(key, 3)

    # Full vocab table; each "rank" holds a contiguous shard (weight_loader semantics).
    full_weight = jax.random.normal(
        k_w, (num_embeddings, embedding_dim), dtype=jnp.float32)

    def run_partial_sum(x):
        # Per-rank partial outputs; dist.all_reduce simulated by summing partials.
        # TODO(synk): real cross-device all_reduce would use shard_map/psum or a
        # remote-DMA Pallas collective; here ranks are simulated on one device.
        y = jnp.zeros(x.shape + (embedding_dim,), dtype=jnp.float32)
        for rank in range(tp_size):
            v0 = rank * vocab_per_partition
            shard = full_weight[v0:v0 + vocab_per_partition]
            y = y + vocab_parallel_embedding_forward(x, shard, v0)
        return jax.block_until_ready(y)

    # case 1: batch=2, seq=8 -> n=16, two 8-token tiles (dual-TC path on v7x)
    x1 = jax.random.randint(k_x1, (2, 8), 0, num_embeddings, dtype=jnp.int32)
    y1 = run_partial_sum(x1)
    ref1 = jnp.take(full_weight, x1, axis=0)
    assert y1.shape == (2, 8, embedding_dim)
    assert jnp.allclose(y1, ref1, atol=1e-5, rtol=1e-5), "case1 mismatch vs reference"

    # case 2: batch=3, seq=5 -> n=15, exercises -1 padding rows
    x2 = jax.random.randint(k_x2, (3, 5), 0, num_embeddings, dtype=jnp.int32)
    y2 = run_partial_sum(x2)
    ref2 = jnp.take(full_weight, x2, axis=0)
    assert y2.shape == (3, 5, embedding_dim)
    assert jnp.allclose(y2, ref2, atol=1e-5, rtol=1e-5), "case2 mismatch vs reference"

    print("KERNEL_OK")
</pallas_src>

<mosaic_0001>
module attributes {stable_mosaic.version = 11 : i64} {
  func.func @_gather_kernel(%arg0: i32, %arg1: memref<16xi32, #tpu.memory_space<smem>>, %arg2: memref<32x128xf32, #tpu.memory_space<any>>, %arg3: memref<8x128xf32, #tpu.memory_space<vmem>>, %arg4: memref<!tpu.dma_semaphore, #tpu.memory_space<semaphore_mem>>) attributes {dimension_semantics = [#tpu.dimension_semantics<parallel>], iteration_bounds = array<i64: 2>, scalar_prefetch = 1 : i64, scratch_operands = 1 : i64, tpu.core_type = #tpu.core_type<tc>, window_params = [{}, {transform_indices = @transform_1, window_bounds = array<i64: 8, 128>}]} {
    %c8_i32 = arith.constant 8 : i32
    %0 = arith.muli %arg0, %c8_i32 : i32
    %cst = arith.constant 0.000000e+00 : f32
    %1 = vector.broadcast %cst : f32 to vector<8x128xf32>
    %c0 = arith.constant 0 : index
    %c0_0 = arith.constant 0 : index
    %2 = vector.load %arg3[%c0, %c0_0] : memref<8x128xf32, #tpu.memory_space<vmem>>, vector<8x128xf32>
    tpu.vector_store %arg3[%c0, %c0_0], %1 {strides = array<i32>} : memref<8x128xf32, #tpu.memory_space<vmem>>, vector<8x128xf32>,
    %c0_i32 = arith.constant 0 : i32
    %c0_i32_1 = arith.constant 0 : i32
    %c8_i32_2 = arith.constant 8 : i32
    %3 = arith.muli %c0_i32_1, %c8_i32_2 : i32
    %c0_i32_3 = arith.constant 0 : i32
    %4 = arith.addi %3, %c0_i32_3 : i32
    %5 = arith.addi %0, %4 : i32
    %6 = arith.index_cast %5 : i32 to index
    %7 = memref.load %arg1[%6] : memref<16xi32, #tpu.memory_space<smem>>
    %c0_i32_4 = arith.constant 0 : i32
    %8 = arith.cmpi sge, %7, %c0_i32_4 : i32
    %c32_i32 = arith.constant 32 : i32
    %9 = arith.cmpi slt, %7, %c32_i32 : i32
    %10 = arith.andi %8, %9 : i1
    %c0_i32_5 = arith.constant 0 : i32
    %11 = arith.subi %7, %c0_i32_5 : i32
    %c0_i32_6 = arith.constant 0 : i32
    %12 = arith.select %10, %11, %c0_i32_6 : i32
    %13 = arith.extui %10 : i1 to i32
    %c0_i32_7 = arith.constant 0 : i32
    %14 = arith.cmpi ne, %13, %c0_i32_7 : i32
    scf.if %14 {
      %c0_i32_52 = arith.constant 0 : i32
      %114 = tpu.memref_slice %arg2[%12, %c0_i32_52] : memref<32x128xf32, #tpu.memory_space<any>> -> memref<1x128xf32, #tpu.memory_space<any>>
      %c0_i32_53 = arith.constant 0 : i32
      %115 = tpu.memref_slice %arg3[%4, %c0_i32_53] : memref<8x128xf32, #tpu.memory_space<vmem>> -> memref<1x128xf32, #tpu.memory_space<vmem>>
      tpu.enqueue_dma source(%114 : memref<1x128xf32, #tpu.memory_space<any>>) target(%115 : memref<1x128xf32, #tpu.memory_space<vmem>>) target_semaphore(%arg4 : memref<!tpu.dma_semaphore, #tpu.memory_space<semaphore_mem>>)
    } else {
    }
    %15 = arith.extui %10 : i1 to i32
    %16 = arith.addi %c0_i32, %15 : i32
    %c1_i32 = arith.constant 1 : i32
    %17 = arith.addi %3, %c1_i32 : i32
    %18 = arith.addi %0, %17 : i32
    %19 = arith.index_cast %18 : i32 to index
    %20 = memref.load %arg1[%19] : memref<16xi32, #tpu.memory_space<smem>>
    %c0_i32_8 = arith.constant 0 : i32
    %21 = arith.cmpi sge, %20, %c0_i32_8 : i32
    %c32_i32_9 = arith.constant 32 : i32
    %22 = arith.cmpi slt, %20, %c32_i32_9 : i32
    %23 = arith.andi %21, %22 : i1
    %c0_i32_10 = arith.constant 0 : i32
    %24 = arith.subi %20, %c0_i32_10 : i32
    %c0_i32_11 = arith.constant 0 : i32
    %25 = arith.select %23, %24, %c0_i32_11 : i32
    %26 = arith.extui %23 : i1 to i32
    %c0_i32_12 = arith.constant 0 : i32
    %27 = arith.cmpi ne, %26, %c0_i32_12 : i32
    scf.if %27 {
      %c0_i32_52 = arith.constant 0 : i32
      %114 = tpu.memref_slice %arg2[%25, %c0_i32_52] : memref<32x128xf32, #tpu.memory_space<any>> -> memref<1x128xf32, #tpu.memory_space<any>>
      %c0_i32_53 = arith.constant 0 : i32
      %115 = tpu.memref_slice %arg3[%17, %c0_i32_53] : memref<8x128xf32, #tpu.memory_space<vmem>> -> memref<1x128xf32, #tpu.memory_space<vmem>>
      tpu.enqueue_dma source(%114 : memref<1x128xf32, #tpu.memory_space<any>>) target(%115 : memref<1x128xf32, #tpu.memory_space<vmem>>) target_semaphore(%arg4 : memref<!tpu.dma_semaphore, #tpu.memory_space<semaphore_mem>>)
    } else {
    }
    %28 = arith.extui %23 : i1 to i32
    %29 = arith.addi %16, %28 : i32
    %c2_i32 = arith.constant 2 : i32
    %30 = arith.addi %3, %c2_i32 : i32
    %31 = arith.addi %0, %30 : i32
    %32 = arith.index_cast %31 : i32 to index
    %33 = memref.load %arg1[%32] : memref<16xi32, #tpu.memory_space<smem>>
    %c0_i32_13 = arith.constant 0 : i32
    %34 = arith.cmpi sge, %33, %c0_i32_13 : i32
    %c32_i32_14 = arith.constant 32 : i32
    %35 = arith.cmpi slt, %33, %c32_i32_14 : i32
    %36 = arith.andi %34, %35 : i1
    %c0_i32_15 = arith.constant 0 : i32
    %37 = arith.subi %33, %c0_i32_15 : i32
    %c0_i32_16 = arith.constant 0 : i32
    %38 = arith.select %36, %37, %c0_i32_16 : i32
    %39 = arith.extui %36 : i1 to i32
    %c0_i32_17 = arith.constant 0 : i32
    %40 = arith.cmpi ne, %39, %c0_i32_17 : i32
    scf.if %40 {
      %c0_i32_52 = arith.constant 0 : i32
      %114 = tpu.memref_slice %arg2[%38, %c0_i32_52] : memref<32x128xf32, #tpu.memory_space<any>> -> memref<1x128xf32, #tpu.memory_space<any>>
      %c0_i32_53 = arith.constant 0 : i32
      %115 = tpu.memref_slice %arg3[%30, %c0_i32_53] : memref<8x128xf32, #tpu.memory_space<vmem>> -> memref<1x128xf32, #tpu.memory_space<vmem>>
      tpu.enqueue_dma source(%114 : memref<1x128xf32, #tpu.memory_space<any>>) target(%115 : memref<1x128xf32, #tpu.memory_space<vmem>>) target_semaphore(%arg4 : memref<!tpu.dma_semaphore, #tpu.memory_space<semaphore_mem>>)
    } else {
    }
    %41 = arith.extui %36 : i1 to i32
    %42 = arith.addi %29, %41 : i32
    %c3_i32 = arith.constant 3 : i32
    %43 = arith.addi %3, %c3_i32 : i32
    %44 = arith.addi %0, %43 : i32
    %45 = arith.index_cast %44 : i32 to index
    %46 = memref.load %arg1[%45] : memref<16xi32, #tpu.memory_space<smem>>
    %c0_i32_18 = arith.constant 0 : i32
    %47 = arith.cmpi sge, %46, %c0_i32_18 : i32
    %c32_i32_19 = arith.constant 32 : i32
    %48 = arith.cmpi slt, %46, %c32_i32_19 : i32
    %49 = arith.andi %47, %48 : i1
    %c0_i32_20 = arith.constant 0 : i32
    %50 = arith.subi %46, %c0_i32_20 : i32
    %c0_i32_21 = arith.constant 0 : i32
    %51 = arith.select %49, %50, %c0_i32_21 : i32
    %52 = arith.extui %49 : i1 to i32
    %c0_i32_22 = arith.constant 0 : i32
    %53 = arith.cmpi ne, %52, %c0_i32_22 : i32
    scf.if %53 {
      %c0_i32_52 = arith.constant 0 : i32
      %114 = tpu.memref_slice %arg2[%51, %c0_i32_52] : memref<32x128xf32, #tpu.memory_space<any>> -> memref<1x128xf32, #tpu.memory_space<any>>
      %c0_i32_53 = arith.constant 0 : i32
      %115 = tpu.memref_slice %arg3[%43, %c0_i32_53] : memref<8x128xf32, #tpu.memory_space<vmem>> -> memref<1x128xf32, #tpu.memory_space<vmem>>
      tpu.enqueue_dma source(%114 : memref<1x128xf32, #tpu.memory_space<any>>) target(%115 : memref<1x128xf32, #tpu.memory_space<vmem>>) target_semaphore(%arg4 : memref<!tpu.dma_semaphore, #tpu.memory_space<semaphore_mem>>)
    } else {
    }
    %54 = arith.extui %49 : i1 to i32
    %55 = arith.addi %42, %54 : i32
    %c4_i32 = arith.constant 4 : i32
    %56 = arith.addi %3, %c4_i32 : i32
    %57 = arith.addi %0, %56 : i32
    %58 = arith.index_cast %57 : i32 to index
    %59 = memref.load %arg1[%58] : memref<16xi32, #tpu.memory_space<smem>>
    %c0_i32_23 = arith.constant 0 : i32
    %60 = arith.cmpi sge, %59, %c0_i32_23 : i32
    %c32_i32_24 = arith.constant 32 : i32
    %61 = arith.cmpi slt, %59, %c32_i32_24 : i32
    %62 = arith.andi %60, %61 : i1
    %c0_i32_25 = arith.constant 0 : i32
    %63 = arith.subi %59, %c0_i32_25 : i32
    %c0_i32_26 = arith.constant 0 : i32
    %64 = arith.select %62, %63, %c0_i32_26 : i32
    %65 = arith.extui %62 : i1 to i32
    %c0_i32_27 = arith.constant 0 : i32
    %66 = arith.cmpi ne, %65, %c0_i32_27 : i32
    scf.if %66 {
      %c0_i32_52 = arith.constant 0 : i32
      %114 = tpu.memref_slice %arg2[%64, %c0_i32_52] : memref<32x128xf32, #tpu.memory_space<any>> -> memref<1x128xf32, #tpu.memory_space<any>>
      %c0_i32_53 = arith.constant 0 : i32
      %115 = tpu.memref_slice %arg3[%56, %c0_i32_53] : memref<8x128xf32, #tpu.memory_space<vmem>> -> memref<1x128xf32, #tpu.memory_space<vmem>>
      tpu.enqueue_dma source(%114 : memref<1x128xf32, #tpu.memory_space<any>>) target(%115 : memref<1x128xf32, #tpu.memory_space<vmem>>) target_semaphore(%arg4 : memref<!tpu.dma_semaphore, #tpu.memory_space<semaphore_mem>>)
    } else {
    }
    %67 = arith.extui %62 : i1 to i32
    %68 = arith.addi %55, %67 : i32
    %c5_i32 = arith.constant 5 : i32
    %69 = arith.addi %3, %c5_i32 : i32
    %70 = arith.addi %0, %69 : i32
    %71 = arith.index_cast %70 : i32 to index
    %72 = memref.load %arg1[%71] : memref<16xi32, #tpu.memory_space<smem>>
    %c0_i32_28 = arith.constant 0 : i32
    %73 = arith.cmpi sge, %72, %c0_i32_28 : i32
    %c32_i32_29 = arith.constant 32 : i32
    %74 = arith.cmpi slt, %72, %c32_i32_29 : i32
    %75 = arith.andi %73, %74 : i1
    %c0_i32_30 = arith.constant 0 : i32
    %76 = arith.subi %72, %c0_i32_30 : i32
    %c0_i32_31 = arith.constant 0 : i32
    %77 = arith.select %75, %76, %c0_i32_31 : i32
    %78 = arith.extui %75 : i1 to i32
    %c0_i32_32 = arith.constant 0 : i32
    %79 = arith.cmpi ne, %78, %c0_i32_32 : i32
    scf.if %79 {
      %c0_i32_52 = arith.constant 0 : i32
      %114 = tpu.memref_slice %arg2[%77, %c0_i32_52] : memref<32x128xf32, #tpu.memory_space<any>> -> memref<1x128xf32, #tpu.memory_space<any>>
      %c0_i32_53 = arith.constant 0 : i32
      %115 = tpu.memref_slice %arg3[%69, %c0_i32_53] : memref<8x128xf32, #tpu.memory_space<vmem>> -> memref<1x128xf32, #tpu.memory_space<vmem>>
      tpu.enqueue_dma source(%114 : memref<1x128xf32, #tpu.memory_space<any>>) target(%115 : memref<1x128xf32, #tpu.memory_space<vmem>>) target_semaphore(%arg4 : memref<!tpu.dma_semaphore, #tpu.memory_space<semaphore_mem>>)
    } else {
    }
    %80 = arith.extui %75 : i1 to i32
    %81 = arith.addi %68, %80 : i32
    %c6_i32 = arith.constant 6 : i32
    %82 = arith.addi %3, %c6_i32 : i32
    %83 = arith.addi %0, %82 : i32
    %84 = arith.index_cast %83 : i32 to index
    %85 = memref.load %arg1[%84] : memref<16xi32, #tpu.memory_space<smem>>
    %c0_i32_33 = arith.constant 0 : i32
    %86 = arith.cmpi sge, %85, %c0_i32_33 : i32
    %c32_i32_34 = arith.constant 32 : i32
    %87 = arith.cmpi slt, %85, %c32_i32_34 : i32
    %88 = arith.andi %86, %87 : i1
    %c0_i32_35 = arith.constant 0 : i32
    %89 = arith.subi %85, %c0_i32_35 : i32
    %c0_i32_36 = arith.constant 0 : i32
    %90 = arith.select %88, %89, %c0_i32_36 : i32
    %91 = arith.extui %88 : i1 to i32
    %c0_i32_37 = arith.constant 0 : i32
    %92 = arith.cmpi ne, %91, %c0_i32_37 : i32
    scf.if %92 {
      %c0_i32_52 = arith.constant 0 : i32
      %114 = tpu.memref_slice %arg2[%90, %c0_i32_52] : memref<32x128xf32, #tpu.memory_space<any>> -> memref<1x128xf32, #tpu.memory_space<any>>
      %c0_i32_53 = arith.constant 0 : i32
      %115 = tpu.memref_slice %arg3[%82, %c0_i32_53] : memref<8x128xf32, #tpu.memory_space<vmem>> -> memref<1x128xf32, #tpu.memory_space<vmem>>
      tpu.enqueue_dma source(%114 : memref<1x128xf32, #tpu.memory_space<any>>) target(%115 : memref<1x128xf32, #tpu.memory_space<vmem>>) target_semaphore(%arg4 : memref<!tpu.dma_semaphore, #tpu.memory_space<semaphore_mem>>)
    } else {
    }
    %93 = arith.extui %88 : i1 to i32
    %94 = arith.addi %81, %93 : i32
    %c7_i32 = arith.constant 7 : i32
    %95 = arith.addi %3, %c7_i32 : i32
    %96 = arith.addi %0, %95 : i32
    %97 = arith.index_cast %96 : i32 to index
    %98 = memref.load %arg1[%97] : memref<16xi32, #tpu.memory_space<smem>>
    %c0_i32_38 = arith.constant 0 : i32
    %99 = arith.cmpi sge, %98, %c0_i32_38 : i32
    %c32_i32_39 = arith.constant 32 : i32
    %100 = arith.cmpi slt, %98, %c32_i32_39 : i32
    %101 = arith.andi %99, %100 : i1
    %c0_i32_40 = arith.constant 0 : i32
    %102 = arith.subi %98, %c0_i32_40 : i32
    %c0_i32_41 = arith.constant 0 : i32
    %103 = arith.select %101, %102, %c0_i32_41 : i32
    %104 = arith.extui %101 : i1 to i32
    %c0_i32_42 = arith.constant 0 : i32
    %105 = arith.cmpi ne, %104, %c0_i32_42 : i32
    scf.if %105 {
      %c0_i32_52 = arith.constant 0 : i32
      %114 = tpu.memref_slice %arg2[%103, %c0_i32_52] : memref<32x128xf32, #tpu.memory_space<any>> -> memref<1x128xf32, #tpu.memory_space<any>>
      %c0_i32_53 = arith.constant 0 : i32
      %115 = tpu.memref_slice %arg3[%95, %c0_i32_53] : memref<8x128xf32, #tpu.memory_space<vmem>> -> memref<1x128xf32, #tpu.memory_space<vmem>>
      tpu.enqueue_dma source(%114 : memref<1x128xf32, #tpu.memory_space<any>>) target(%115 : memref<1x128xf32, #tpu.memory_space<vmem>>) target_semaphore(%arg4 : memref<!tpu.dma_semaphore, #tpu.memory_space<semaphore_mem>>)
    } else {
    }
    %106 = arith.extui %101 : i1 to i32
    %107 = arith.addi %94, %106 : i32
    %c1_i32_43 = arith.constant 1 : i32
    %c0_i32_44 = arith.constant 0 : i32
    %108 = arith.subi %107, %c0_i32_44 : i32
    %c1_i32_45 = arith.constant 1 : i32
    %c1_i32_46 = arith.constant 1 : i32
    %109 = arith.subi %c1_i32_45, %c1_i32_46 : i32
    %110 = arith.addi %108, %109 : i32
    %c1_i32_47 = arith.constant 1 : i32
    %111 = arith.divsi %110, %c1_i32_47 : i32
    %c1_i32_48 = arith.constant 1 : i32
    %c0_i32_49 = arith.constant 0 : i32
    %c0_i32_50 = arith.constant 0 : i32
    %112 = arith.subi %111, %c0_i32_50 : i32
    %113 = arith.addi %c0_i32_50, %112 : i32
    %c1_i32_51 = arith.constant 1 : i32
    scf.for %arg5 = %c0_i32_50 to %113 step %c1_i32_51  : i32 {
      %114 = arith.muli %arg5, %c1_i32_48 : i32
      %115 = arith.addi %c0_i32_49, %114 : i32
      %c0_i32_52 = arith.constant 0 : i32
      %c0_i32_53 = arith.constant 0 : i32
      %116 = tpu.memref_slice %arg2[%c0_i32_52, %c0_i32_53] : memref<32x128xf32, #tpu.memory_space<any>> -> memref<1x128xf32, #tpu.memory_space<any>>
      %c0_i32_54 = arith.constant 0 : i32
      %c0_i32_55 = arith.constant 0 : i32
      %117 = tpu.memref_slice %arg3[%c0_i32_54, %c0_i32_55] : memref<8x128xf32, #tpu.memory_space<vmem>> -> memref<1x128xf32, #tpu.memory_space<vmem>>
      tpu.wait_dma2 semaphore(%arg4 : memref<!tpu.dma_semaphore, #tpu.memory_space<semaphore_mem>>) src(%116 : memref<1x128xf32, #tpu.memory_space<any>>) dst(%117 : memref<1x128xf32, #tpu.memory_space<vmem>>)
    }
    return
  }
  func.func @transform_1(%arg0: i32, %arg1: memref<16xi32, #tpu.memory_space<smem>>) -> (i32, i32) {
    %c0_i32 = arith.constant 0 : i32
    %c0_i32_0 = arith.constant 0 : i32
    return %arg0, %c0_i32 : i32, i32
  }
}

</mosaic_0001>

<llo_original>
// kernel: tpu_custom_call.1
$region0: #{tpu_custom_call.1}
  #allocation0 [shape = 'u32[]', space=smem, size = 0x4, offset = 0x4, fixed_abs, tag = 'smem constant byte address 0x4 - core index']
  #allocation1 [shape = 'u32[72,128]{1,0:T(1,128)}', space=vmem, size = 0x9000, scoped, tag = 'internal scratch']
  #allocation2 [shape = 's32[1]{0}', space=sflag, size = 0x4, scoped, tag = 'scratch operand']
  #allocation3 [shape = 's32[1]{0}', space=sflag, size = 0x4, scoped, tag = 'scoped memory for tpu_custom_call.1']
  #allocation4 [shape = 'u8[512]{0}', space=smem, size = 0x200, scoped, tag = 'prefetched SMEM operand 0']
  #allocation7 [shape = 's32[]', space=sflag, size = 0x4, offset = 0, fixed_abs, tag = 'sflag constant byte address 0x0 - dummy sync flag']
  #allocation8 [shape = 's32[]', space=sflag, size = 0x4, offset = 0, fixed_abs, tag = 'sflag constant byte address 0x0 - dummy sync flag']
  #allocation9 [shape = 'u32[]', space=smem, size = 0x4, offset = 0x44, fixed_abs, tag = 'smem constant byte address 0x44 - assertion arg 0']
  #allocation10 [shape = 'u32[]', space=smem, size = 0x4, offset = 0x48, fixed_abs, tag = 'smem constant byte address 0x48 - assertion arg 1']
  #allocation11 [shape = 's32[]', space=sflag, size = 0x4, offset = 0, fixed_abs, tag = 'sflag constant byte address 0x0 - dummy sync flag']
  #allocation12 [shape = 's32[]', space=sflag, size = 0x4, offset = 0, fixed_abs, tag = 'sflag constant byte address 0x0 - dummy sync flag']
  #allocation13 [shape = 's32[]', space=sflag, size = 0x4, offset = 0, fixed_abs, tag = 'sflag constant byte address 0x0 - dummy sync flag']
  #allocation14 [shape = 's32[]', space=sflag, size = 0x4, offset = 0, fixed_abs, tag = 'sflag constant byte address 0x0 - dummy sync flag']
  #allocation15 [shape = 's32[]', space=sflag, size = 0x4, offset = 0, fixed_abs, tag = 'sflag constant byte address 0x0 - dummy sync flag']
  #allocation16 [shape = 's32[]', space=sflag, size = 0x4, offset = 0, fixed_abs, tag = 'sflag constant byte address 0x0 - dummy sync flag']
  #allocation17 [shape = 's32[]', space=sflag, size = 0x4, offset = 0, fixed_abs, tag = 'sflag constant byte address 0x0 - dummy sync flag']
  #allocation18 [shape = 's32[]', space=sflag, size = 0x4, offset = 0, fixed_abs, tag = 'sflag constant byte address 0x0 - dummy sync flag']
  #allocation19 [shape = 's32[]', space=sflag, size = 0x4, offset = 0, fixed_abs, tag = 'sflag constant byte address 0x0 - dummy sync flag']
  #allocation20 [shape = 's32[]', space=sflag, size = 0x4, offset = 0, fixed_abs, tag = 'sflag constant byte address 0x0 - dummy sync flag']
  #allocation21 [shape = 's32[]', space=sflag, size = 0x4, offset = 0, fixed_abs, tag = 'sflag constant byte address 0x0 - dummy sync flag']
  #allocation22 [shape = 's32[]', space=sflag, size = 0x4, offset = 0, fixed_abs, tag = 'sflag constant byte address 0x0 - dummy sync flag']
  #allocation23 [shape = 's32[]', space=sflag, size = 0x4, offset = 0, fixed_abs, tag = 'sflag constant byte address 0x0 - dummy sync flag']
  #allocation24 [shape = 's32[]', space=sflag, size = 0x4, offset = 0, fixed_abs, tag = 'sflag constant byte address 0x0 - dummy sync flag']
  %s0 = inlined_call_operand.hbm [shape: s32[16], index: 0, kind: input, shape index: {}]
  %s1 = inlined_call_operand.hbm [shape: f32[32,128], index: 1, kind: input, shape index: {}]
  %s2 = inlined_call_operand.hbm [shape: f32[16,128], index: 2, kind: output, shape index: {}]
  %s3 = sld [smem:[#allocation0]]
  $region96: #{tpu_custom_call.1} parent=0
    _
  %s5 = ssub.s32 1, %s3
  %s6 = scalar_select 0, %s5, %s3
  %s8 = sshll.u32 %s0, 4
  %s9 = int_to_ptr.hbm [resolvable:$true] %s8
  %11 = dma.hbm_to_smem %s9, 16, [#allocation4], [#allocation3]
  %13 = dma.done [#allocation3], 16
  %14 = sfence
  $region1: #{tpu_custom_call.1} parent=0
    #allocation5 [shape = 'u8[8192]{0}', space=vmem, size = 0x2000, scoped, tag = 'output window, operand 0']
    #allocation6 [shape = 's32[2]{0}', space=sflag, size = 0x8, scoped, tag = 'scoped memory for tpu_custom_call.1']
    %15 = vsyncpa [#allocation6], 0
    %s16 = scalar_lea.sflag [#allocation6], 1
    %17 = vsyncpa %s16, 0
    loop: start=0, step=1, limit=3
    $region2: #{tpu_custom_call.1} parent=1 // loop_pre_header
      _
    $region3: #{tpu_custom_call.1} parent=1 // loop_header
      %s19 = sphi 0, %s23
      %p20 = scmp.ge.s32.totalorder %s19, 3
      %s28 = sphi 0, %s30
      %s31 = sphi 0, %s28
      %s41 = sphi 0, %s31
    $region4: #{tpu_custom_call.1} parent=1 // loop_header_branch
      %22 = sbr.rel (%p20) target = $region8
    $region5: #{tpu_custom_call.1} parent=1 // loop_body
      %s24 = ssub.s32 %s19, 1
      %s25 = sadd.s32 %s19, 1
      %s26 = ssub.s32 %s19, %s25
      %p27 = scmp.eq.s32.totalorder %s26, 0
      %s29 = sadd.s32 %s28, 1
      %s30 = scalar_select %p27, %s28, %s29
      %p32 = pneg %p27
      %p33 = scmp.eq.s32.totalorder %s19, 1
      %p34 = por %p32, %p33
      %p35 = scmp.ne.s32.totalorder %s28, %s31
      %p36 = scmp.eq.s32.totalorder %s19, 0
      %p37 = por %p35, %p36
      %p38 = scmp.ne.s32.totalorder %s28, %s31
      %p39 = scmp.eq.s32.totalorder %s24, 1
      %p40 = por %p38, %p39
      %p42 = scmp.ne.s32.totalorder %s31, %s41
      %p43 = scmp.eq.s32.totalorder %s24, 0
      %p44 = por %p42, %p43
      %p45 = scmp.lt.s32.totalorder %s19, 2
      // Predicated region
      $region9: #{tpu_custom_call.1} parent=5 // pred_check
        %p46 = pneg %p45
      $region10: #{tpu_custom_call.1} parent=5 // pred_check_branch
        %48 = sbr.rel (%p46) target = $region12
      $region11: #{tpu_custom_call.1} parent=5 // pred_region
        %p49 = pneg %p37
        %p50 = pneg %p34
        %s51 = sand.u32 %s28, 1
        %s52 = scalar_lea.sflag [#allocation6], %s51
        %s53 = sand.u32 %s28, 1
        %s54 = smul.addr %s53, 8
        %s55 = scalar_lea.vmem [#allocation5], %s54
        %s56 = smul.u32 %s19, 8
        %57 = vst [vmem:[%s55] sm:$0xff] 0.0
        %s58 = sld [smem:[#allocation4 + %s56]]
        %p59 = scmp.ge.s32.totalorder %s58, 0
        %p60 = scmp.lt.s32.totalorder %s58, 32
        %p61 = pnand %p59, %p60
        %p62 = pneg %p61
        %s63 = scalar_select %p62, %s58, 0
        // Predicated region
        $region13: #{tpu_custom_call.1} parent=11 // pred_check
          _
        $region14: #{tpu_custom_call.1} parent=11 // pred_check_branch
          %65 = sbr.rel (%p61) target = $region16
        $region15: #{tpu_custom_call.1} parent=11 // pred_region
          %s66 = scalar_lea.hbm %s1, %s63
          // Predicated region
          $region17: #{tpu_custom_call.1} parent=15 // pred_check
            _
          $region18: #{tpu_custom_call.1} parent=15 // pred_check_branch
            %68 = sbr.rel target = $region20
          $region19: #{tpu_custom_call.1} parent=15 // pred_region
            %69 = sst [smem:[#allocation9]] [#allocation8]
            %70 = sst [smem:[#allocation10]] [#allocation7]
          $region20: #{tpu_custom_call.1} parent=15 // pred_fallthru
            _
          %72 = shalt.err (0)
          %s74 = sshll.u32 %s66, 4
          %s75 = int_to_ptr.hbm [resolvable:$true] %s74
          %s76 = sshll.u32 %s55, 4
          %s77 = int_to_ptr.vmem [resolvable:$true] %s76
          %79 = dma.hbm_to_vmem [thread:$0]  %s75, 16, %s77, [#allocation2]
        $region16: #{tpu_custom_call.1} parent=11 // pred_fallthru
          _
        %s80 = scalar_select %p62, 1, 0
        %s81 = sadd.s32 %s56, 1
        %s82 = sld [smem:[#allocation4 + %s81]]
        %p83 = scmp.ge.s32.totalorder %s82, 0
        %p84 = scmp.lt.s32.totalorder %s82, 32
        %p85 = pnand %p83, %p84
        %p86 = pneg %p85
        %s87 = scalar_select %p86, %s82, 0
        // Predicated region
        $region21: #{tpu_custom_call.1} parent=11 // pred_check
          _
        $region22: #{tpu_custom_call.1} parent=11 // pred_check_branch
          %89 = sbr.rel (%p85) target = $region24
        $region23: #{tpu_custom_call.1} parent=11 // pred_region
          %s90 = scalar_lea.hbm %s1, %s87
          %s91 = scalar_lea.vmem %s55, 1 [#allocation5]
          // Predicated region
          $region25: #{tpu_custom_call.1} parent=23 // pred_check
            _
          $region26: #{tpu_custom_call.1} parent=23 // pred_check_branch
            %93 = sbr.rel target = $region28
          $region27: #{tpu_custom_call.1} parent=23 // pred_region
            %94 = sst [smem:[#allocation9]] [#allocation12]
            %95 = sst [smem:[#allocation10]] [#allocation11]
          $region28: #{tpu_custom_call.1} parent=23 // pred_fallthru
            _
          %97 = shalt.err (0)
          %s99 = sshll.u32 %s90, 4
          %s100 = int_to_ptr.hbm [resolvable:$true] %s99
          %s101 = sshll.u32 %s91, 4
          %s102 = int_to_ptr.vmem [resolvable:$true] %s101
          %104 = dma.hbm_to_vmem [thread:$0]  %s100, 16, %s102, [#allocation2]
        $region24: #{tpu_custom_call.1} parent=11 // pred_fallthru
          _
        %s105 = scalar_select %p86, 1, 0
        %s106 = sadd.s32 %s80, %s105
        %s107 = sadd.s32 %s56, 2
        %s108 = sld [smem:[#allocation4 + %s107]]
        %p109 = scmp.ge.s32.totalorder %s108, 0
        %p110 = scmp.lt.s32.totalorder %s108, 32
        %p111 = pnand %p109, %p110
        %p112 = pneg %p111
        %s113 = scalar_select %p112, %s108, 0
        // Predicated region
        $region29: #{tpu_custom_call.1} parent=11 // pred_check
          _
        $region30: #{tpu_custom_call.1} parent=11 // pred_check_branch
          %115 = sbr.rel (%p111) target = $region32
        $region31: #{tpu_custom_call.1} parent=11 // pred_region
          %s116 = scalar_lea.hbm %s1, %s113
          %s117 = scalar_lea.vmem %s55, 2 [#allocation5]
          // Predicated region
          $region33: #{tpu_custom_call.1} parent=31 // pred_check
            _
          $region34: #{tpu_custom_call.1} parent=31 // pred_check_branch
            %119 = sbr.rel target = $region36
          $region35: #{tpu_custom_call.1} parent=31 // pred_region
            %120 = sst [smem:[#allocation9]] [#allocation14]
            %121 = sst [smem:[#allocation10]] [#allocation13]
          $region36: #{tpu_custom_call.1} parent=31 // pred_fallthru
            _
          %123 = shalt.err (0)
          %s125 = sshll.u32 %s116, 4
          %s126 = int_to_ptr.hbm [resolvable:$true] %s125
          %s127 = sshll.u32 %s117, 4
          %s128 = int_to_ptr.vmem [resolvable:$true] %s127
          %130 = dma.hbm_to_vmem [thread:$0]  %s126, 16, %s128, [#allocation2]
        $region32: #{tpu_custom_call.1} parent=11 // pred_fallthru
          _
        %s131 = scalar_select %p112, 1, 0
        %s132 = sadd.s32 %s106, %s131
        %s133 = sadd.s32 %s56, 3
        %s134 = sld [smem:[#allocation4 + %s133]]
        %p135 = scmp.ge.s32.totalorder %s134, 0
        %p136 = scmp.lt.s32.totalorder %s134, 32
        %p137 = pnand %p135, %p136
        %p138 = pneg %p137
        %s139 = scalar_select %p138, %s134, 0
        // Predicated region
        $region37: #{tpu_custom_call.1} parent=11 // pred_check
          _
        $region38: #{tpu_custom_call.1} parent=11 // pred_check_branch
          %141 = sbr.rel (%p137) target = $region40
        $region39: #{tpu_custom_call.1} parent=11 // pred_region
          %s142 = scalar_lea.hbm %s1, %s139
          %s143 = scalar_lea.vmem %s55, 3 [#allocation5]
          // Predicated region
          $region41: #{tpu_custom_call.1} parent=39 // pred_check
            _
          $region42: #{tpu_custom_call.1} parent=39 // pred_check_branch
            %145 = sbr.rel target = $region44
          $region43: #{tpu_custom_call.1} parent=39 // pred_region
            %146 = sst [smem:[#allocation9]] [#allocation16]
            %147 = sst [smem:[#allocation10]] [#allocation15]
          $region44: #{tpu_custom_call.1} parent=39 // pred_fallthru
            _
          %149 = shalt.err (0)
          %s151 = sshll.u32 %s142, 4
          %s152 = int_to_ptr.hbm [resolvable:$true] %s151
          %s153 = sshll.u32 %s143, 4
          %s154 = int_to_ptr.vmem [resolvable:$true] %s153
          %156 = dma.hbm_to_vmem [thread:$0]  %s152, 16, %s154, [#allocation2]
        $region40: #{tpu_custom_call.1} parent=11 // pred_fallthru
          _
        %s157 = scalar_select %p138, 1, 0
        %s158 = sadd.s32 %s132, %s157
        %s159 = sadd.s32 %s56, 4
        %s160 = sld [smem:[#allocation4 + %s159]]
        %p161 = scmp.ge.s32.totalorder %s160, 0
        %p162 = scmp.lt.s32.totalorder %s160, 32
        %p163 = pnand %p161, %p162
        %p164 = pneg %p163
        %s165 = scalar_select %p164, %s160, 0
        // Predicated region
        $region45: #{tpu_custom_call.1} parent=11 // pred_check
          _
        $region46: #{tpu_custom_call.1} parent=11 // pred_check_branch
          %167 = sbr.rel (%p163) target = $region48
        $region47: #{tpu_custom_call.1} parent=11 // pred_region
          %s168 = scalar_lea.hbm %s1, %s165
          %s169 = scalar_lea.vmem %s55, 4 [#allocation5]
          // Predicated region
          $region49: #{tpu_custom_call.1} parent=47 // pred_check
            _
          $region50: #{tpu_custom_call.1} parent=47 // pred_check_branch
            %171 = sbr.rel target = $region52
          $region51: #{tpu_custom_call.1} parent=47 // pred_region
            %172 = sst [smem:[#allocation9]] [#allocation18]
            %173 = sst [smem:[#allocation10]] [#allocation17]
          $region52: #{tpu_custom_call.1} parent=47 // pred_fallthru
            _
          %175 = shalt.err (0)
          %s177 = sshll.u32 %s168, 4
          %s178 = int_to_ptr.hbm [resolvable:$true] %s177
          %s179 = sshll.u32 %s169, 4
          %s180 = int_to_ptr.vmem [resolvable:$true] %s179
          %182 = dma.hbm_to_vmem [thread:$0]  %s178, 16, %s180, [#allocation2]
        $region48: #{tpu_custom_call.1} parent=11 // pred_fallthru
          _
        %s183 = scalar_select %p164, 1, 0
        %s184 = sadd.s32 %s158, %s183
        %s185 = sadd.s32 %s56, 5
        %s186 = sld [smem:[#allocation4 + %s185]]
        %p187 = scmp.ge.s32.totalorder %s186, 0
        %p188 = scmp.lt.s32.totalorder %s186, 32
        %p189 = pnand %p187, %p188
        %p190 = pneg %p189
        %s191 = scalar_select %p190, %s186, 0
        // Predicated region
        $region53: #{tpu_custom_call.1} parent=11 // pred_check
          _
        $region54: #{tpu_custom_call.1} parent=11 // pred_check_branch
          %193 = sbr.rel (%p189) target = $region56
        $region55: #{tpu_custom_call.1} parent=11 // pred_region
          %s194 = scalar_lea.hbm %s1, %s191
          %s195 = scalar_lea.vmem %s55, 5 [#allocation5]
          // Predicated region
          $region57: #{tpu_custom_call.1} parent=55 // pred_check
            _
          $region58: #{tpu_custom_call.1} parent=55 // pred_check_branch
            %197 = sbr.rel target = $region60
          $region59: #{tpu_custom_call.1} parent=55 // pred_region
            %198 = sst [smem:[#allocation9]] [#allocation20]
            %199 = sst [smem:[#allocation10]] [#allocation19]
          $region60: #{tpu_custom_call.1} parent=55 // pred_fallthru
            _
          %201 = shalt.err (0)
          %s203 = sshll.u32 %s194, 4
          %s204 = int_to_ptr.hbm [resolvable:$true] %s203
          %s205 = sshll.u32 %s195, 4
          %s206 = int_to_ptr.vmem [resolvable:$true] %s205
          %208 = dma.hbm_to_vmem [thread:$0]  %s204, 16, %s206, [#allocation2]
        $region56: #{tpu_custom_call.1} parent=11 // pred_fallthru
          _
        %s209 = scalar_select %p190, 1, 0
        %s210 = sadd.s32 %s184, %s209
        %s211 = sadd.s32 %s56, 6
        %s212 = sld [smem:[#allocation4 + %s211]]
        %p213 = scmp.ge.s32.totalorder %s212, 0
        %p214 = scmp.lt.s32.totalorder %s212, 32
        %p215 = pnand %p213, %p214
        %p216 = pneg %p215
        %s217 = scalar_select %p216, %s212, 0
        // Predicated region
        $region61: #{tpu_custom_call.1} parent=11 // pred_check
          _
        $region62: #{tpu_custom_call.1} parent=11 // pred_check_branch
          %219 = sbr.rel (%p215) target = $region64
        $region63: #{tpu_custom_call.1} parent=11 // pred_region
          %s220 = scalar_lea.hbm %s1, %s217
          %s221 = scalar_lea.vmem %s55, 6 [#allocation5]
          // Predicated region
          $region65: #{tpu_custom_call.1} parent=63 // pred_check
            _
          $region66: #{tpu_custom_call.1} parent=63 // pred_check_branch
            %223 = sbr.rel target = $region68
          $region67: #{tpu_custom_call.1} parent=63 // pred_region
            %224 = sst [smem:[#allocation9]] [#allocation22]
            %225 = sst [smem:[#allocation10]] [#allocation21]
          $region68: #{tpu_custom_call.1} parent=63 // pred_fallthru
            _
          %227 = shalt.err (0)
          %s229 = sshll.u32 %s220, 4
          %s230 = int_to_ptr.hbm [resolvable:$true] %s229
          %s231 = sshll.u32 %s221, 4
          %s232 = int_to_ptr.vmem [resolvable:$true] %s231
          %234 = dma.hbm_to_vmem [thread:$0]  %s230, 16, %s232, [#allocation2]
        $region64: #{tpu_custom_call.1} parent=11 // pred_fallthru
          _
        %s235 = scalar_select %p216, 1, 0
        %s236 = sadd.s32 %s210, %s235
        %s237 = sadd.s32 %s56, 7
        %s238 = sld [smem:[#allocation4 + %s237]]
        %p239 = scmp.ge.s32.totalorder %s238, 0
        %p240 = scmp.lt.s32.totalorder %s238, 32
        %p241 = pnand %p239, %p240
        %p242 = pneg %p241
        %s243 = scalar_select %p242, %s238, 0
        // Predicated region
        $region69: #{tpu_custom_call.1} parent=11 // pred_check
          _
        $region70: #{tpu_custom_call.1} parent=11 // pred_check_branch
          %245 = sbr.rel (%p241) target = $region72
        $region71: #{tpu_custom_call.1} parent=11 // pred_region
          %s246 = scalar_lea.hbm %s1, %s243
          %s247 = scalar_lea.vmem %s55, 7 [#allocation5]
          // Predicated region
          $region73: #{tpu_custom_call.1} parent=71 // pred_check
            _
          $region74: #{tpu_custom_call.1} parent=71 // pred_check_branch
            %249 = sbr.rel target = $region76
          $region75: #{tpu_custom_call.1} parent=71 // pred_region
            %250 = sst [smem:[#allocation9]] [#allocation24]
            %251 = sst [smem:[#allocation10]] [#allocation23]
          $region76: #{tpu_custom_call.1} parent=71 // pred_fallthru
            _
          %253 = shalt.err (0)
          %s255 = sshll.u32 %s246, 4
          %s256 = int_to_ptr.hbm [resolvable:$true] %s255
          %s257 = sshll.u32 %s247, 4
          %s258 = int_to_ptr.vmem [resolvable:$true] %s257
          %260 = dma.hbm_to_vmem [thread:$0]  %s256, 16, %s258, [#allocation2]
        $region72: #{tpu_custom_call.1} parent=11 // pred_fallthru
          _
        %s261 = scalar_select %p242, 1, 0
        %s262 = sadd.s32 %s236, %s261
        // While loop
        $region77: #{tpu_custom_call.1} parent=11 // loop_pre_header
          _
        $region78: #{tpu_custom_call.1} parent=11 // loop_header
          %s264 = sphi 0, %s266
          %p265 = scmp.ge.s32.totalorder %s264, %s262
        $region79: #{tpu_custom_call.1} parent=11 // loop_header_branch
          %268 = sbr.rel (%p265) target = $region83
        $region80: #{tpu_custom_call.1} parent=11 // loop_body
          %s269 = smul.u32 1, 1
          %s270 = sshll.u32 %s269, 4
          %271 = dma.done [#allocation2], %s270
        $region81: #{tpu_custom_call.1} parent=11 // loop_footer
          %s266 = sadd.s32 %s264, 1
        $region82: #{tpu_custom_call.1} parent=11 // loop_footer_branch
          %263 = sbr.rel target = $region78
        $region83: #{tpu_custom_call.1} parent=11 // loop_exit
          _
        %s272 = sand.u32 %s28, 1
        %s273 = scalar_lea.sflag [#allocation6], %s272
        %s274 = sand.u32 %s28, 1
        %s275 = smul.addr %s274, 8
        %s276 = scalar_lea.vmem [#allocation5], %s275
        // Predicated region
        $region84: #{tpu_custom_call.1} parent=11 // pred_check
          %p277 = pneg %p34
        $region85: #{tpu_custom_call.1} parent=11 // pred_check_branch
          %279 = sbr.rel (%p277) target = $region87
        $region86: #{tpu_custom_call.1} parent=11 // pred_region
          %281 = vsyncadd %s273, 0
          %s282 = smul.addr %s19, 8
          %s283 = scalar_lea.hbm %s2, %s282
          %s285 = sshll.u32 %s276, 4
          %s286 = int_to_ptr.vmem [resolvable:$true] %s285
          %s287 = sshll.u32 %s283, 4
          %s288 = int_to_ptr.hbm [resolvable:$true] %s287
          %290 = dma.vmem_to_hbm [thread:$0]  %s286, 128, %s288, %s273
        $region87: #{tpu_custom_call.1} parent=11 // pred_fallthru
          _
      $region12: #{tpu_custom_call.1} parent=5 // pred_fallthru
        _
      %p291 = scmp.le.s32.totalorder 1, %s19
      // Predicated region
      $region88: #{tpu_custom_call.1} parent=5 // pred_check
        %p292 = pneg %p291
      $region89: #{tpu_custom_call.1} parent=5 // pred_check_branch
        %294 = sbr.rel (%p292) target = $region91
      $region90: #{tpu_custom_call.1} parent=5 // pred_region
        %s295 = ssub.s32 %s19, 1
        // Predicated region
        $region92: #{tpu_custom_call.1} parent=90 // pred_check
          %p296 = pneg %p40
        $region93: #{tpu_custom_call.1} parent=90 // pred_check_branch
          %298 = sbr.rel (%p296) target = $region95
        $region94: #{tpu_custom_call.1} parent=90 // pred_region
          %s299 = sand.u32 %s31, 1
          %s300 = scalar_lea.sflag [#allocation6], %s299
          %s301 = sand.u32 %s31, 1
          %s302 = smul.addr %s301, 8
          %s303 = scalar_lea.vmem [#allocation5], %s302
          %305 = dma.done %s300, 128
        $region95: #{tpu_custom_call.1} parent=90 // pred_fallthru
          _
      $region91: #{tpu_custom_call.1} parent=5 // pred_fallthru
        _
    $region6: #{tpu_custom_call.1} parent=1 // loop_footer
      %s23 = sadd.s32 1, %s19
    $region7: #{tpu_custom_call.1} parent=1 // loop_footer_branch
      %18 = sbr.rel target = $region3
    $region8: #{tpu_custom_call.1} parent=1 // loop_exit
      _
    %306 = vsyncpa [#allocation6], 1
    %s307 = scalar_lea.sflag [#allocation6], 1
    %308 = vsyncpa %s307, 1
  %309 = vsyncmov [#allocation2]
  %s310 = vpop.sfrf %309
  %p311 = scmp.eq.s32.totalorder %s310, 0
  %p312 = pneg %p311
  %314 = shalt.err (%p312)

</llo_original>
